<compile_context>
chip_gen: v7x
topology: tpu7x:2x2x1
jax: 0.10.0
libtpu: 0.0.40
codegen_flags: <defaults>
</compile_context>

<pallas_src>
import functools

import jax
import jax.numpy as jnp
from jax.experimental import pallas as pl
from jax.experimental.pallas import tpu as pltpu


def _fused_conv1x1_relu_kernel(x_ref, w0_ref, wr_ref, b_ref, o_ref, *, num_rest):
    # x_ref : (C_in, thw)                current spatial tile of one batch item
    # w0_ref: (C_out, C_in)              first-layer weight
    # wr_ref: (max(L-1,1), C_out, C_out) remaining-layer weights
    # b_ref : (L, C_out, 1)              biases as lane-broadcastable columns
    # o_ref : (C_out, thw)               lane-dense output tile
    x = x_ref[...]
    y = jnp.dot(w0_ref[...], x, preferred_element_type=jnp.float32)
    y = jnp.maximum(y + b_ref[0], 0.0)
    for l in range(num_rest):  # static, small layer count -> unrolled
        y = jnp.dot(wr_ref[l], y, preferred_element_type=jnp.float32)
        y = jnp.maximum(y + b_ref[l + 1], 0.0)
    o_ref[...] = y.astype(o_ref.dtype)


def conv_block_2d_pallas(x3d, w0, w_rest, b_all, *, tile_hw=1024):
    """Fused 1x1-conv+ReLU stack over NCHW data with spatial flattened to HW.

    x3d:    (N, C_in, HW) float32
    w0:     (C_out, C_in)
    w_rest: (max(L-1, 1), C_out, C_out)
    b_all:  (L, C_out, 1)
    """
    N, cin, hw = x3d.shape
    cout = w0.shape[0]
    L = b_all.shape[0]
    num_rest = L - 1

    # Lane-dense spatial tile: either the full HW extent (always legal as a
    # block dim), or a 128-multiple tile with a cdiv grid (partial last block
    # is masked by Pallas; columns are independent so padding is harmless).
    if hw <= tile_hw:
        thw = hw
        n_tiles = 1
    else:
        thw = tile_hw
        n_tiles = pl.cdiv(hw, thw)

    kernel = functools.partial(_fused_conv1x1_relu_kernel, num_rest=num_rest)

    return pl.pallas_call(
        kernel,
        out_shape=jax.ShapeDtypeStruct((N, cout, hw), x3d.dtype),
        grid=(N, n_tiles),
        in_specs=[
            pl.BlockSpec((None, cin, thw), lambda n, t: (n, 0, t)),
            # Weights/biases: full-array blocks, constant block index ->
            # DMA'd once, effectively resident in VMEM for the whole grid.
            pl.BlockSpec((cout, cin), lambda n, t: (0, 0)),
            pl.BlockSpec(w_rest.shape, lambda n, t: (0, 0, 0)),
            pl.BlockSpec(b_all.shape, lambda n, t: (0, 0, 0)),
        ],
        out_specs=pl.BlockSpec((None, cout, thw), lambda n, t: (n, 0, t)),
        compiler_params=pltpu.CompilerParams(
            dimension_semantics=("parallel", "parallel"),
        ),
    )(x3d, w0, w_rest, b_all)


def init_conv_block_params(key, input_channels, output_channels, layers):
    """Deterministic params matching nn.Conv2d(k=1): W_l = weight[:, :, 0, 0]."""
    assert layers >= 1
    ws, bs = [], []
    cin = input_channels
    for _ in range(layers):
        key, kw, kb = jax.random.split(key, 3)
        bound = 1.0 / jnp.sqrt(jnp.float32(cin))  # PyTorch-default-ish bound
        w = jax.random.uniform(kw, (output_channels, cin), jnp.float32,
                               minval=-bound, maxval=bound)
        b = jax.random.uniform(kb, (output_channels,), jnp.float32,
                               minval=-bound, maxval=bound)
        ws.append(w)
        bs.append(b)
        cin = output_channels
    w0 = ws[0]
    if layers > 1:
        w_rest = jnp.stack(ws[1:], axis=0)
    else:
        w_rest = jnp.zeros((1, output_channels, output_channels), jnp.float32)
    b_all = jnp.stack(bs, axis=0).reshape(layers, output_channels, 1)
    return (w0, w_rest, b_all)


@jax.jit
def conv_block_2d_forward(x_nchw, params):
    """Forward pass of conv_block_2D: (N, C_in, H, W) -> (N, C_out, H, W)."""
    N, C, H, W = x_nchw.shape
    w0, w_rest, b_all = params
    x3d = x_nchw.reshape(N, C, H * W)        # free reshape, stays NCHW
    y3d = conv_block_2d_pallas(x3d, w0, w_rest, b_all)
    return y3d.reshape(N, w0.shape[0], H, W)


if __name__ == "__main__":
    key = jax.random.PRNGKey(0)
    kx, kp = jax.random.split(key)

    N, C_in, H, W = 2, 4, 16, 16
    C_out, layers = 8, 3

    x = jax.random.normal(kx, (N, C_in, H, W), jnp.float32)
    params = init_conv_block_params(kp, C_in, C_out, layers)

    out = conv_block_2d_forward(x, params)
    out = jax.block_until_ready(out)

    # Reference in plain JAX (same NCHW math, no Pallas).
    w0, w_rest, b_all = params
    ref = x.reshape(N, C_in, H * W)
    ref = jnp.maximum(jnp.einsum('oc,nch->noh', w0, ref) + b_all[0][None], 0.0)
    for l in range(layers - 1):
        ref = jnp.maximum(
            jnp.einsum('oc,nch->noh', w_rest[l], ref) + b_all[l + 1][None], 0.0)
    ref = ref.reshape(N, C_out, H, W)

    assert out.shape == (N, C_out, H, W)
    assert jnp.allclose(out, ref, atol=1e-5, rtol=1e-5)
    print("KERNEL_OK")
</pallas_src>

<mosaic_0001>
module attributes {stable_mosaic.version = 11 : i64} {
  func.func @_fused_conv1x1_relu_kernel(%arg0: i32, %arg1: i32, %arg2: memref<1x4x256xf32, #tpu.memory_space<vmem>>, %arg3: memref<8x4xf32, #tpu.memory_space<vmem>>, %arg4: memref<2x8x8xf32, #tpu.memory_space<vmem>>, %arg5: memref<3x8x1xf32, #tpu.memory_space<vmem>>, %arg6: memref<1x8x256xf32, #tpu.memory_space<vmem>>) attributes {dimension_semantics = [#tpu.dimension_semantics<parallel>, #tpu.dimension_semantics<parallel>], iteration_bounds = array<i64: 2, 1>, scalar_prefetch = 0 : i64, scratch_operands = 0 : i64, tpu.core_type = #tpu.core_type<tc>, window_params = [{transform_indices = @transform_0, window_bounds = array<i64: 1, 4, 256>}, {pipeline_mode = #tpu.pipeline_mode<synchronous>, transform_indices = @transform_1, window_bounds = array<i64: 8, 4>}, {pipeline_mode = #tpu.pipeline_mode<synchronous>, transform_indices = @transform_2, window_bounds = array<i64: 2, 8, 8>}, {pipeline_mode = #tpu.pipeline_mode<synchronous>, transform_indices = @transform_3, window_bounds = array<i64: 3, 8, 1>}, {transform_indices = @transform_4, window_bounds = array<i64: 1, 8, 256>}]} {
    %c0 = arith.constant 0 : index
    %c0_0 = arith.constant 0 : index
    %c0_1 = arith.constant 0 : index
    %0 = vector.load %arg2[%c0, %c0_0, %c0_1] : memref<1x4x256xf32, #tpu.memory_space<vmem>>, vector<1x4x256xf32>
    %1 = vector.shape_cast %0 : vector<1x4x256xf32> to vector<4x256xf32>
    %c0_2 = arith.constant 0 : index
    %c0_3 = arith.constant 0 : index
    %2 = vector.load %arg3[%c0_2, %c0_3] : memref<8x4xf32, #tpu.memory_space<vmem>>, vector<8x4xf32>
    %cst = arith.constant dense<0.000000e+00> : vector<8x256xf32>
    %3 = tpu.matmul %2, %1, %cst {dimension_numbers = #tpu.dot_dimension_numbers<[1], [0], [0], [1], [0, 0, 1, 1], [], []>} : vector<8x4xf32>, vector<4x256xf32>, vector<8x256xf32> -> vector<8x256xf32>
    %c0_4 = arith.constant 0 : index
    %c0_5 = arith.constant 0 : index
    %c0_6 = arith.constant 0 : index
    %4 = vector.load %arg5[%c0_4, %c0_5, %c0_6] : memref<3x8x1xf32, #tpu.memory_space<vmem>>, vector<1x8x1xf32>
    %5 = vector.shape_cast %4 : vector<1x8x1xf32> to vector<8x1xf32>
    %6 = vector.broadcast %5 : vector<8x1xf32> to vector<8x256xf32>
    %7 = arith.addf %3, %6 : vector<8x256xf32>
    %cst_7 = arith.constant 0.000000e+00 : f32
    %8 = vector.broadcast %cst_7 : f32 to vector<8x256xf32>
    %9 = arith.maximumf %7, %8 : vector<8x256xf32>
    %c0_8 = arith.constant 0 : index
    %c0_9 = arith.constant 0 : index
    %c0_10 = arith.constant 0 : index
    %10 = vector.load %arg4[%c0_8, %c0_9, %c0_10] : memref<2x8x8xf32, #tpu.memory_space<vmem>>, vector<1x8x8xf32>
    %11 = vector.shape_cast %10 : vector<1x8x8xf32> to vector<8x8xf32>
    %cst_11 = arith.constant dense<0.000000e+00> : vector<8x256xf32>
    %12 = tpu.matmul %11, %9, %cst_11 {dimension_numbers = #tpu.dot_dimension_numbers<[1], [0], [0], [1], [0, 0, 1, 1], [], []>} : vector<8x8xf32>, vector<8x256xf32>, vector<8x256xf32> -> vector<8x256xf32>
    %c1 = arith.constant 1 : index
    %c0_12 = arith.constant 0 : index
    %c0_13 = arith.constant 0 : index
    %13 = vector.load %arg5[%c1, %c0_12, %c0_13] : memref<3x8x1xf32, #tpu.memory_space<vmem>>, vector<1x8x1xf32>
    %14 = vector.shape_cast %13 : vector<1x8x1xf32> to vector<8x1xf32>
    %15 = vector.broadcast %14 : vector<8x1xf32> to vector<8x256xf32>
    %16 = arith.addf %12, %15 : vector<8x256xf32>
    %cst_14 = arith.constant 0.000000e+00 : f32
    %17 = vector.broadcast %cst_14 : f32 to vector<8x256xf32>
    %18 = arith.maximumf %16, %17 : vector<8x256xf32>
    %c1_15 = arith.constant 1 : index
    %c0_16 = arith.constant 0 : index
    %c0_17 = arith.constant 0 : index
    %19 = vector.load %arg4[%c1_15, %c0_16, %c0_17] : memref<2x8x8xf32, #tpu.memory_space<vmem>>, vector<1x8x8xf32>
    %20 = vector.shape_cast %19 : vector<1x8x8xf32> to vector<8x8xf32>
    %cst_18 = arith.constant dense<0.000000e+00> : vector<8x256xf32>
    %21 = tpu.matmul %20, %18, %cst_18 {dimension_numbers = #tpu.dot_dimension_numbers<[1], [0], [0], [1], [0, 0, 1, 1], [], []>} : vector<8x8xf32>, vector<8x256xf32>, vector<8x256xf32> -> vector<8x256xf32>
    %c2 = arith.constant 2 : index
    %c0_19 = arith.constant 0 : index
    %c0_20 = arith.constant 0 : index
    %22 = vector.load %arg5[%c2, %c0_19, %c0_20] : memref<3x8x1xf32, #tpu.memory_space<vmem>>, vector<1x8x1xf32>
    %23 = vector.shape_cast %22 : vector<1x8x1xf32> to vector<8x1xf32>
    %24 = vector.broadcast %23 : vector<8x1xf32> to vector<8x256xf32>
    %25 = arith.addf %21, %24 : vector<8x256xf32>
    %cst_21 = arith.constant 0.000000e+00 : f32
    %26 = vector.broadcast %cst_21 : f32 to vector<8x256xf32>
    %27 = arith.maximumf %25, %26 : vector<8x256xf32>
    %c0_22 = arith.constant 0 : index
    %c0_23 = arith.constant 0 : index
    %c0_24 = arith.constant 0 : index
    %28 = vector.load %arg6[%c0_22, %c0_23, %c0_24] : memref<1x8x256xf32, #tpu.memory_space<vmem>>, vector<1x8x256xf32>
    %29 = vector.shape_cast %28 : vector<1x8x256xf32> to vector<8x256xf32>
    %30 = vector.shape_cast %27 : vector<8x256xf32> to vector<1x8x256xf32>
    tpu.vector_store %arg6[%c0_22, %c0_23, %c0_24], %30 {strides = array<i32>} : memref<1x8x256xf32, #tpu.memory_space<vmem>>, vector<1x8x256xf32>,
    return
  }
  func.func @transform_0(%arg0: i32, %arg1: i32) -> (i32, i32, i32) {
    %c0_i32 = arith.constant 0 : i32
    %c0_i32_0 = arith.constant 0 : i32
    return %arg0, %c0_i32, %arg1 : i32, i32, i32
  }
  func.func @transform_1(%arg0: i32, %arg1: i32) -> (i32, i32) {
    %c0_i32 = arith.constant 0 : i32
    %c0_i32_0 = arith.constant 0 : i32
    %c0_i32_1 = arith.constant 0 : i32
    return %c0_i32, %c0_i32_0 : i32, i32
  }
  func.func @transform_2(%arg0: i32, %arg1: i32) -> (i32, i32, i32) {
    %c0_i32 = arith.constant 0 : i32
    %c0_i32_0 = arith.constant 0 : i32
    %c0_i32_1 = arith.constant 0 : i32
    %c0_i32_2 = arith.constant 0 : i32
    return %c0_i32, %c0_i32_0, %c0_i32_1 : i32, i32, i32
  }
  func.func @transform_3(%arg0: i32, %arg1: i32) -> (i32, i32, i32) {
    %c0_i32 = arith.constant 0 : i32
    %c0_i32_0 = arith.constant 0 : i32
    %c0_i32_1 = arith.constant 0 : i32
    %c0_i32_2 = arith.constant 0 : i32
    return %c0_i32, %c0_i32_0, %c0_i32_1 : i32, i32, i32
  }
  func.func @transform_4(%arg0: i32, %arg1: i32) -> (i32, i32, i32) {
    %c0_i32 = arith.constant 0 : i32
    %c0_i32_0 = arith.constant 0 : i32
    return %arg0, %c0_i32, %arg1 : i32, i32, i32
  }
}

</mosaic_0001>

<llo_original>
// kernel: conv_block_2d_forward.1
$region0: #{conv_block_2d_forward.1}
  #allocation0 [shape = 'u32[]', space=smem, size = 0x4, offset = 0x4, fixed_abs, tag = 'smem constant byte address 0x4 - core index']
  #allocation1 [shape = 'u32[144,128]{1,0:T(1,128)}', space=vmem, size = 0x12000, scoped, tag = 'internal scratch']
  %s0 = inlined_call_operand.vmem [shape: f32[2,4,256], index: 0, kind: input, shape index: {}]
  %s1 = inlined_call_operand.vmem [shape: f32[8,4], index: 1, kind: input, shape index: {}]
  %s2 = inlined_call_operand.vmem [shape: f32[2,8,8], index: 2, kind: input, shape index: {}]
  %s3 = inlined_call_operand.vmem [shape: f32[3,8,1], index: 3, kind: input, shape index: {}]
  %s4 = inlined_call_operand.vmem [shape: f32[2,8,256], index: 4, kind: output, shape index: {}]
  %s5 = sld [smem:[#allocation0]]
  $region49: #{conv_block_2d_forward.1} parent=0
    _
  %s7 = ssub.s32 1, %s5
  %s8 = scalar_select 0, %s7, %s5
  loop: start=0, step=1, limit=4
  $region2: #{conv_block_2d_forward.1} parent=0 // loop_pre_header
    _
  $region3: #{conv_block_2d_forward.1} parent=0 // loop_header
    %s10 = sphi 0, %s14
    %p11 = scmp.ge.s32.totalorder %s10, 4
    %s17 = sphi 0, %s29
    %s18 = sphi 0, %s25
    %s19 = sphi 0, %s17
    %s20 = sphi 0, %s18
    %s21 = sphi 0, %s19
    %s22 = sphi 0, %s20
    %s34 = sphi 0, %s36
    %s37 = sphi 0, %s34
    %s38 = sphi 0, %s37
    %s54 = sphi 0, %s38
    %s58 = sphi 0, %s58
    %s60 = sphi 0, %s58
    %s61 = sphi 0, %s60
    %s75 = sphi 0, %s61
    %s79 = sphi 0, %s79
    %s81 = sphi 0, %s79
    %s82 = sphi 0, %s81
    %s96 = sphi 0, %s82
    %s100 = sphi 0, %s100
    %s102 = sphi 0, %s100
    %s103 = sphi 0, %s102
    %s117 = sphi 0, %s103
    %s125 = sphi 0, %s127
    %s128 = sphi 0, %s125
    %s129 = sphi 0, %s128
    %s145 = sphi 0, %s129
  $region4: #{conv_block_2d_forward.1} parent=0 // loop_header_branch
    %13 = sbr.rel (%p11) target = $region8
  $region5: #{conv_block_2d_forward.1} parent=0 // loop_body
    %s15 = ssub.s32 %s10, 1
    %s16 = ssub.s32 %s10, 2
    %s23 = sadd.s32 1, %s18
    %p24 = scmp.ge.s32.totalorder %s23, 1
    %s25 = scalar_select %p24, 0, %s23
    %s26 = sadd.s32 1, %s17
    %s27 = scalar_select %p24, %s26, %s17
    %p28 = scmp.ge.s32.totalorder %s27, 2
    %s29 = scalar_select %p28, 0, %s27
    %s30 = ssub.s32 %s17, %s29
    %s31 = ssub.s32 %s18, %s25
    %s32 = sor.u32 %s30, %s31
    %p33 = scmp.eq.s32.totalorder %s32, 0
    %s35 = sadd.s32 %s34, 1
    %s36 = scalar_select %p33, %s34, %s35
    %p39 = pneg %p33
    %p40 = scmp.eq.s32.totalorder %s10, 1
    %p41 = por %p39, %p40
    %p42 = scmp.ne.s32.totalorder %s34, %s37
    %p43 = scmp.eq.s32.totalorder %s10, 0
    %p44 = por %p42, %p43
    %p45 = scmp.ne.s32.totalorder %s34, %s37
    %p46 = scmp.eq.s32.totalorder %s15, 1
    %p47 = por %p45, %p46
    %p48 = scmp.ne.s32.totalorder %s37, %s38
    %p49 = scmp.eq.s32.totalorder %s15, 0
    %p50 = por %p48, %p49
    %p51 = scmp.ne.s32.totalorder %s37, %s38
    %p52 = scmp.eq.s32.totalorder %s16, 1
    %p53 = por %p51, %p52
    %p55 = scmp.ne.s32.totalorder %s38, %s54
    %p56 = scmp.eq.s32.totalorder %s16, 0
    %p57 = por %p55, %p56
    %s59 = sadd.s32 %s58, 1
    %p62 = scmp.eq.s32.totalorder %s10, 1
    %p63 = scmp.ne.s32.totalorder %s58, %s60
    %p64 = scmp.eq.s32.totalorder %s10, 0
    %p65 = por %p63, %p64
    %p66 = scmp.ne.s32.totalorder %s58, %s60
    %p67 = scmp.eq.s32.totalorder %s15, 1
    %p68 = por %p66, %p67
    %p69 = scmp.ne.s32.totalorder %s60, %s61
    %p70 = scmp.eq.s32.totalorder %s15, 0
    %p71 = por %p69, %p70
    %p72 = scmp.ne.s32.totalorder %s60, %s61
    %p73 = scmp.eq.s32.totalorder %s16, 1
    %p74 = por %p72, %p73
    %p76 = scmp.ne.s32.totalorder %s61, %s75
    %p77 = scmp.eq.s32.totalorder %s16, 0
    %p78 = por %p76, %p77
    %s80 = sadd.s32 %s79, 1
    %p83 = scmp.eq.s32.totalorder %s10, 1
    %p84 = scmp.ne.s32.totalorder %s79, %s81
    %p85 = scmp.eq.s32.totalorder %s10, 0
    %p86 = por %p84, %p85
    %p87 = scmp.ne.s32.totalorder %s79, %s81
    %p88 = scmp.eq.s32.totalorder %s15, 1
    %p89 = por %p87, %p88
    %p90 = scmp.ne.s32.totalorder %s81, %s82
    %p91 = scmp.eq.s32.totalorder %s15, 0
    %p92 = por %p90, %p91
    %p93 = scmp.ne.s32.totalorder %s81, %s82
    %p94 = scmp.eq.s32.totalorder %s16, 1
    %p95 = por %p93, %p94
    %p97 = scmp.ne.s32.totalorder %s82, %s96
    %p98 = scmp.eq.s32.totalorder %s16, 0
    %p99 = por %p97, %p98
    %s101 = sadd.s32 %s100, 1
    %p104 = scmp.eq.s32.totalorder %s10, 1
    %p105 = scmp.ne.s32.totalorder %s100, %s102
    %p106 = scmp.eq.s32.totalorder %s10, 0
    %p107 = por %p105, %p106
    %p108 = scmp.ne.s32.totalorder %s100, %s102
    %p109 = scmp.eq.s32.totalorder %s15, 1
    %p110 = por %p108, %p109
    %p111 = scmp.ne.s32.totalorder %s102, %s103
    %p112 = scmp.eq.s32.totalorder %s15, 0
    %p113 = por %p111, %p112
    %p114 = scmp.ne.s32.totalorder %s102, %s103
    %p115 = scmp.eq.s32.totalorder %s16, 1
    %p116 = por %p114, %p115
    %p118 = scmp.ne.s32.totalorder %s103, %s117
    %p119 = scmp.eq.s32.totalorder %s16, 0
    %p120 = por %p118, %p119
    %s121 = ssub.s32 %s17, %s29
    %s122 = ssub.s32 %s18, %s25
    %s123 = sor.u32 %s121, %s122
    %p124 = scmp.eq.s32.totalorder %s123, 0
    %s126 = sadd.s32 %s125, 1
    %s127 = scalar_select %p124, %s125, %s126
    %p130 = pneg %p124
    %p131 = scmp.eq.s32.totalorder %s10, 1
    %p132 = por %p130, %p131
    %p133 = scmp.ne.s32.totalorder %s125, %s128
    %p134 = scmp.eq.s32.totalorder %s10, 0
    %p135 = por %p133, %p134
    %p136 = scmp.ne.s32.totalorder %s125, %s128
    %p137 = scmp.eq.s32.totalorder %s15, 1
    %p138 = por %p136, %p137
    %p139 = scmp.ne.s32.totalorder %s128, %s129
    %p140 = scmp.eq.s32.totalorder %s15, 0
    %p141 = por %p139, %p140
    %p142 = scmp.ne.s32.totalorder %s128, %s129
    %p143 = scmp.eq.s32.totalorder %s16, 1
    %p144 = por %p142, %p143
    %p146 = scmp.ne.s32.totalorder %s129, %s145
    %p147 = scmp.eq.s32.totalorder %s16, 0
    %p148 = por %p146, %p147
    %p149 = scmp.le.s32.totalorder 1, %s10
    %p150 = scmp.lt.s32.totalorder %s10, 3
    %p151 = pnand %p149, %p150
    %p152 = pneg %p151
    // Predicated region
    $region9: #{conv_block_2d_forward.1} parent=5 // pred_check
      _
    $region10: #{conv_block_2d_forward.1} parent=5 // pred_check_branch
      %154 = sbr.rel (%p151) target = $region12
    $region11: #{conv_block_2d_forward.1} parent=5 // pred_region
      %s155 = ssub.s32 %s10, 1
      // Predicated region
      $region13: #{conv_block_2d_forward.1} parent=11 // pred_check
        %p156 = pneg %p71
      $region14: #{conv_block_2d_forward.1} parent=11 // pred_check_branch
        %158 = sbr.rel (%p156) target = $region16
      $region15: #{conv_block_2d_forward.1} parent=11 // pred_region
        _
      $region16: #{conv_block_2d_forward.1} parent=11 // pred_fallthru
        _
      // Predicated region
      $region17: #{conv_block_2d_forward.1} parent=11 // pred_check
        %p159 = pneg %p92
      $region18: #{conv_block_2d_forward.1} parent=11 // pred_check_branch
        %161 = sbr.rel (%p159) target = $region20
      $region19: #{conv_block_2d_forward.1} parent=11 // pred_region
        _
      $region20: #{conv_block_2d_forward.1} parent=11 // pred_fallthru
        _
      // Predicated region
      $region21: #{conv_block_2d_forward.1} parent=11 // pred_check
        %p162 = pneg %p113
      $region22: #{conv_block_2d_forward.1} parent=11 // pred_check_branch
        %164 = sbr.rel (%p162) target = $region24
      $region23: #{conv_block_2d_forward.1} parent=11 // pred_region
        _
      $region24: #{conv_block_2d_forward.1} parent=11 // pred_fallthru
        _
    $region12: #{conv_block_2d_forward.1} parent=5 // pred_fallthru
      _
    %p165 = scmp.lt.s32.totalorder %s10, 2
    // Predicated region
    $region25: #{conv_block_2d_forward.1} parent=5 // pred_check
      %p166 = pneg %p165
    $region26: #{conv_block_2d_forward.1} parent=5 // pred_check_branch
      %168 = sbr.rel (%p166) target = $region28
    $region27: #{conv_block_2d_forward.1} parent=5 // pred_region
      // Predicated region
      $region29: #{conv_block_2d_forward.1} parent=27 // pred_check
        %p169 = pneg %p44
      $region30: #{conv_block_2d_forward.1} parent=27 // pred_check_branch
        %171 = sbr.rel (%p169) target = $region32
      $region31: #{conv_block_2d_forward.1} parent=27 // pred_region
        %s172 = smul.u32 2, %s18
        %p173 = scmp.lt.s32.totalorder %s17, 1
        %s174 = scalar_select %p173, %s17, 1
        %p175 = scmp.lt.s32.totalorder %s172, 1
        %s176 = scalar_select %p175, %s172, 1
        %s177 = smul.addr %s174, 2
        %s178 = sadd.s32 %s176, %s177
        %s179 = smul.addr %s178, 4
        %s180 = scalar_lea.vmem %s0, %s179
        %s181 = smul.u32 2, %s18
      $region32: #{conv_block_2d_forward.1} parent=27 // pred_fallthru
        _
    $region28: #{conv_block_2d_forward.1} parent=5 // pred_fallthru
      _
    %p182 = scmp.le.s32.totalorder 1, %s10
    %p183 = scmp.lt.s32.totalorder %s10, 3
    %p184 = pnand %p182, %p183
    %p185 = pneg %p184
    // Predicated region
    $region33: #{conv_block_2d_forward.1} parent=5 // pred_check
      _
    $region34: #{conv_block_2d_forward.1} parent=5 // pred_check_branch
      %187 = sbr.rel (%p184) target = $region36
    $region35: #{conv_block_2d_forward.1} parent=5 // pred_region
      %s188 = ssub.s32 %s10, 1
      %s189 = smul.u32 2, %s20
      %p190 = scmp.lt.s32.totalorder %s19, 1
      %s191 = scalar_select %p190, %s19, 1
      %p192 = scmp.lt.s32.totalorder %s189, 1
      %s193 = scalar_select %p192, %s189, 1
      %s194 = smul.addr %s191, 2
      %s195 = sadd.s32 %s193, %s194
      %s196 = smul.addr %s195, 4
      %s197 = scalar_lea.vmem %s0, %s196
      %p198 = pneg %p50
      %p199 = pneg %p47
      %p200 = pneg %p71
      %p201 = pneg %p68
      %p202 = pneg %p92
      %p203 = pneg %p89
      %p204 = pneg %p113
      %p205 = pneg %p110
      %p206 = pneg %p141
      %p207 = pneg %p138
      %s208 = smul.u32 2, %s20
      %p209 = scmp.lt.s32.totalorder %s19, 1
      %s210 = scalar_select %p209, %s19, 1
      %p211 = scmp.lt.s32.totalorder %s208, 1
      %s212 = scalar_select %p211, %s208, 1
      %s213 = smul.addr %s210, 2
      %s214 = sadd.s32 %s212, %s213
      %s215 = smul.addr %s214, 8
      %s216 = scalar_lea.vmem %s4, %s215
      %s217 = smul.u32 2, %s20
      %p218 = scmp.lt.s32.totalorder %s19, 1
      %s219 = scalar_select %p218, %s19, 1
      %p220 = scmp.lt.s32.totalorder %s217, 1
      %s221 = scalar_select %p220, %s217, 1
      %s222 = smul.addr %s219, 2
      %s223 = sadd.s32 %s221, %s222
      %s224 = smul.addr %s223, 4
      %s225 = scalar_lea.vmem %s0, %s224
      %s226 = smul.u32 2, %s20
      %s227 = smul.u32 2, %s20
      %p228 = scmp.lt.s32.totalorder %s19, 1
      %s229 = scalar_select %p228, %s19, 1
      %p230 = scmp.lt.s32.totalorder %s227, 1
      %s231 = scalar_select %p230, %s227, 1
      %s232 = smul.addr %s229, 2
      %s233 = sadd.s32 %s231, %s232
      %s234 = smul.addr %s233, 8
      %s235 = scalar_lea.vmem %s4, %s234
      %s236 = smul.u32 2, %s20
      %v237 = vld [vmem:[%s225] sm:$0xff]
      %v238 = vld [vmem:[%s1] sm:$0xff]
      %v239 = vld [vmem:[%s3] sm:$0xff]
      %241 = vset.pattern.permute.xlu0 0
      %242 = vperm.xlu0 %241, %v239
      %v243 = vpop.permute.xlu0 %242
      %v246 = vcombine.high %v237, %v237
      %vm247 = vcmask 31744
      %v249 = vsel %vm247, %v238, 0
      %vm251 = vcmask 1043456
      %v252 = vsel %vm251, %v237, 0
      %v254 = vsel %vm251, %v246, 0
      %256 = vmatprep.subr.mxu0 %v254
      %257 = vmatpush1.msra.mxu0 %v252
      %258 = vmatprep.subr.mxu0 0.0
      %259 = vmatpush1.msra.mxu0 0.0
      %260 = vmatprep.subr.mxu0 0.0
      %261 = vmatpush1.msra.mxu0 0.0
      %262 = vmatprep.subr.mxu0 0.0
      %263 = vmatpush1.msra.mxu0 0.0
      %264 = vmatprep.subr.mxu0 0.0
      %265 = vmatpush1.msra.mxu0 0.0
      %266 = vmatprep.subr.mxu0 0.0
      %267 = vmatpush1.msra.mxu0 0.0
      %268 = vmatprep.subr.mxu0 0.0
      %269 = vmatpush1.msra.mxu0 0.0
      %270 = vmatprep.subr.mxu0 0.0
      %271 = vmatpush1.msra.mxu0 0.0
      %272 = vmatprep.subr.mxu0 0.0
      %273 = vmatpush1.msra.mxu0 0.0
      %274 = vmatprep.subr.mxu0 0.0
      %275 = vmatpush1.msra.mxu0 0.0
      %276 = vmatprep.subr.mxu0 0.0
      %277 = vmatpush1.msra.mxu0 0.0
      %278 = vmatprep.subr.mxu0 0.0
      %279 = vmatpush1.msra.mxu0 0.0
      %280 = vmatprep.subr.mxu0 0.0
      %281 = vmatpush1.msra.mxu0 0.0
      %282 = vmatprep.subr.mxu0 0.0
      %283 = vmatpush1.msra.mxu0 0.0
      %284 = vmatprep.subr.mxu0 0.0
      %285 = vmatpush1.msra.mxu0 0.0
      %286 = vmatprep.subr.mxu0 0.0
      %287 = vmatpush1.msra.mxu0 0.0
      %288 = vmatprep.subr.mxu0 0.0
      %289 = vmatpush1.msra.mxu0 0.0
      %290 = vmatprep.subr.mxu0 0.0
      %291 = vmatpush1.msra.mxu0 0.0
      %292 = vmatprep.subr.mxu0 0.0
      %293 = vmatpush1.msra.mxu0 0.0
      %294 = vmatprep.subr.mxu0 0.0
      %295 = vmatpush1.msra.mxu0 0.0
      %296 = vmatprep.subr.mxu0 0.0
      %297 = vmatpush1.msra.mxu0 0.0
      %298 = vmatprep.subr.mxu0 0.0
      %299 = vmatpush1.msra.mxu0 0.0
      %300 = vmatprep.subr.mxu0 0.0
      %301 = vmatpush1.msra.mxu0 0.0
      %302 = vmatprep.subr.mxu0 0.0
      %303 = vmatpush1.msra.mxu0 0.0
      %304 = vmatprep.subr.mxu0 0.0
      %305 = vmatpush1.msra.mxu0 0.0
      %306 = vmatprep.subr.mxu0 0.0
      %307 = vmatpush1.msra.mxu0 0.0
      %308 = vmatprep.subr.mxu0 0.0
      %309 = vmatpush1.msra.mxu0 0.0
      %310 = vmatprep.subr.mxu0 0.0
      %311 = vmatpush1.msra.mxu0 0.0
      %312 = vmatprep.subr.mxu0 0.0
      %313 = vmatpush1.msra.mxu0 0.0
      %314 = vmatprep.subr.mxu0 0.0
      %315 = vmatpush1.msra.mxu0 0.0
      %316 = vmatprep.subr.mxu0 0.0
      %317 = vmatpush1.msra.mxu0 0.0
      %318 = vmatprep.subr.mxu0 0.0
      %319 = vmatpush1.msra.mxu0 0.0
      %320 = vmatprep.mubr.f32.mxu0 0.0
      %321 = vmatmul.mubr.f32.gmra.mrb[0].mxu0 %v249
      %v322 = vpop.f32.mrb[0].mxu0
      %v323 = vadd.f32 %v243, %v322
      %v324 = vpop.f32.mrb[0].mxu0
      %v325 = vadd.f32 %v243, %v324
      %326 = vdwg.mxu0
      %v327 = vmax.f32 %v323, 0.0
      %v328 = vmax.f32 %v325, 0.0
      %v329 = vld [vmem:[%s2] sm:$0xff]
      %s330 = scalar_lea.vmem %s3, 8
      %v331 = vld [vmem:[%s330] sm:$0xff]
      %333 = vset.pattern.permute.xlu0 0
      %334 = vperm.xlu0 %333, %v331
      %v335 = vpop.permute.xlu0 %334
      %vm337 = vcmask 64512
      %v339 = vsel %vm337, %v329, 0
      %341 = vmatprep.subr.mxu0 %v328
      %342 = vmatpush1.msra.mxu0 %v327
      %343 = vmatprep.subr.mxu0 0.0
      %344 = vmatpush1.msra.mxu0 0.0
      %345 = vmatprep.subr.mxu0 0.0
      %346 = vmatpush1.msra.mxu0 0.0
      %347 = vmatprep.subr.mxu0 0.0
      %348 = vmatpush1.msra.mxu0 0.0
      %349 = vmatprep.subr.mxu0 0.0
      %350 = vmatpush1.msra.mxu0 0.0
      %351 = vmatprep.subr.mxu0 0.0
      %352 = vmatpush1.msra.mxu0 0.0
      %353 = vmatprep.subr.mxu0 0.0
      %354 = vmatpush1.msra.mxu0 0.0
      %355 = vmatprep.subr.mxu0 0.0
      %356 = vmatpush1.msra.mxu0 0.0
      %357 = vmatprep.subr.mxu0 0.0
      %358 = vmatpush1.msra.mxu0 0.0
      %359 = vmatprep.subr.mxu0 0.0
      %360 = vmatpush1.msra.mxu0 0.0
      %361 = vmatprep.subr.mxu0 0.0
      %362 = vmatpush1.msra.mxu0 0.0
      %363 = vmatprep.subr.mxu0 0.0
      %364 = vmatpush1.msra.mxu0 0.0
      %365 = vmatprep.subr.mxu0 0.0
      %366 = vmatpush1.msra.mxu0 0.0
      %367 = vmatprep.subr.mxu0 0.0
      %368 = vmatpush1.msra.mxu0 0.0
      %369 = vmatprep.subr.mxu0 0.0
      %370 = vmatpush1.msra.mxu0 0.0
      %371 = vmatprep.subr.mxu0 0.0
      %372 = vmatpush1.msra.mxu0 0.0
      %373 = vmatprep.subr.mxu0 0.0
      %374 = vmatpush1.msra.mxu0 0.0
      %375 = vmatprep.subr.mxu0 0.0
      %376 = vmatpush1.msra.mxu0 0.0
      %377 = vmatprep.subr.mxu0 0.0
      %378 = vmatpush1.msra.mxu0 0.0
      %379 = vmatprep.subr.mxu0 0.0
      %380 = vmatpush1.msra.mxu0 0.0
      %381 = vmatprep.subr.mxu0 0.0
      %382 = vmatpush1.msra.mxu0 0.0
      %383 = vmatprep.subr.mxu0 0.0
      %384 = vmatpush1.msra.mxu0 0.0
      %385 = vmatprep.subr.mxu0 0.0
      %386 = vmatpush1.msra.mxu0 0.0
      %387 = vmatprep.subr.mxu0 0.0
      %388 = vmatpush1.msra.mxu0 0.0
      %389 = vmatprep.subr.mxu0 0.0
      %390 = vmatpush1.msra.mxu0 0.0
      %391 = vmatprep.subr.mxu0 0.0
      %392 = vmatpush1.msra.mxu0 0.0
      %393 = vmatprep.subr.mxu0 0.0
      %394 = vmatpush1.msra.mxu0 0.0
      %395 = vmatprep.subr.mxu0 0.0
      %396 = vmatpush1.msra.mxu0 0.0
      %397 = vmatprep.subr.mxu0 0.0
      %398 = vmatpush1.msra.mxu0 0.0
      %399 = vmatprep.subr.mxu0 0.0
      %400 = vmatpush1.msra.mxu0 0.0
      %401 = vmatprep.subr.mxu0 0.0
      %402 = vmatpush1.msra.mxu0 0.0
      %403 = vmatprep.subr.mxu0 0.0
      %404 = vmatpush1.msra.mxu0 0.0
      %405 = vmatprep.mubr.f32.mxu0 0.0
      %406 = vmatmul.mubr.f32.gmra.mrb[0].mxu0 %v339
      %v407 = vpop.f32.mrb[0].mxu0
      %v408 = vadd.f32 %v335, %v407
      %v409 = vpop.f32.mrb[0].mxu0
      %v410 = vadd.f32 %v335, %v409
      %411 = vdwg.mxu0
      %v412 = vmax.f32 %v408, 0.0
      %v413 = vmax.f32 %v410, 0.0
      %s414 = scalar_lea.vmem %s2, 8
      %v415 = vld [vmem:[%s414] sm:$0xff]
      %s416 = scalar_lea.vmem %s3, 16
      %v417 = vld [vmem:[%s416] sm:$0xff]
      %419 = vset.pattern.permute.xlu0 0
      %420 = vperm.xlu0 %419, %v417
      %v421 = vpop.permute.xlu0 %420
      %v424 = vsel %vm337, %v415, 0
      %426 = vmatprep.subr.mxu0 %v413
      %427 = vmatpush1.msra.mxu0 %v412
      %428 = vmatprep.subr.mxu0 0.0
      %429 = vmatpush1.msra.mxu0 0.0
      %430 = vmatprep.subr.mxu0 0.0
      %431 = vmatpush1.msra.mxu0 0.0
      %432 = vmatprep.subr.mxu0 0.0
      %433 = vmatpush1.msra.mxu0 0.0
      %434 = vmatprep.subr.mxu0 0.0
      %435 = vmatpush1.msra.mxu0 0.0
      %436 = vmatprep.subr.mxu0 0.0
      %437 = vmatpush1.msra.mxu0 0.0
      %438 = vmatprep.subr.mxu0 0.0
      %439 = vmatpush1.msra.mxu0 0.0
      %440 = vmatprep.subr.mxu0 0.0
      %441 = vmatpush1.msra.mxu0 0.0
      %442 = vmatprep.subr.mxu0 0.0
      %443 = vmatpush1.msra.mxu0 0.0
      %444 = vmatprep.subr.mxu0 0.0
      %445 = vmatpush1.msra.mxu0 0.0
      %446 = vmatprep.subr.mxu0 0.0
      %447 = vmatpush1.msra.mxu0 0.0
      %448 = vmatprep.subr.mxu0 0.0
      %449 = vmatpush1.msra.mxu0 0.0
      %450 = vmatprep.subr.mxu0 0.0
      %451 = vmatpush1.msra.mxu0 0.0
      %452 = vmatprep.subr.mxu0 0.0
      %453 = vmatpush1.msra.mxu0 0.0
      %454 = vmatprep.subr.mxu0 0.0
      %455 = vmatpush1.msra.mxu0 0.0
      %456 = vmatprep.subr.mxu0 0.0
      %457 = vmatpush1.msra.mxu0 0.0
      %458 = vmatprep.subr.mxu0 0.0
      %459 = vmatpush1.msra.mxu0 0.0
      %460 = vmatprep.subr.mxu0 0.0
      %461 = vmatpush1.msra.mxu0 0.0
      %462 = vmatprep.subr.mxu0 0.0
      %463 = vmatpush1.msra.mxu0 0.0
      %464 = vmatprep.subr.mxu0 0.0
      %465 = vmatpush1.msra.mxu0 0.0
      %466 = vmatprep.subr.mxu0 0.0
      %467 = vmatpush1.msra.mxu0 0.0
      %468 = vmatprep.subr.mxu0 0.0
      %469 = vmatpush1.msra.mxu0 0.0
      %470 = vmatprep.subr.mxu0 0.0
      %471 = vmatpush1.msra.mxu0 0.0
      %472 = vmatprep.subr.mxu0 0.0
      %473 = vmatpush1.msra.mxu0 0.0
      %474 = vmatprep.subr.mxu0 0.0
      %475 = vmatpush1.msra.mxu0 0.0
      %476 = vmatprep.subr.mxu0 0.0
      %477 = vmatpush1.msra.mxu0 0.0
      %478 = vmatprep.subr.mxu0 0.0
      %479 = vmatpush1.msra.mxu0 0.0
      %480 = vmatprep.subr.mxu0 0.0
      %481 = vmatpush1.msra.mxu0 0.0
      %482 = vmatprep.subr.mxu0 0.0
      %483 = vmatpush1.msra.mxu0 0.0
      %484 = vmatprep.subr.mxu0 0.0
      %485 = vmatpush1.msra.mxu0 0.0
      %486 = vmatprep.subr.mxu0 0.0
      %487 = vmatpush1.msra.mxu0 0.0
      %488 = vmatprep.subr.mxu0 0.0
      %489 = vmatpush1.msra.mxu0 0.0
      %490 = vmatprep.mubr.f32.mxu0 0.0
      %491 = vmatmul.mubr.f32.gmra.mrb[0].mxu0 %v424
      %v492 = vpop.f32.mrb[0].mxu0
      %v493 = vadd.f32 %v421, %v492
      %v494 = vpop.f32.mrb[0].mxu0
      %v495 = vadd.f32 %v421, %v494
      %496 = vdwg.mxu0
      %v497 = vmax.f32 %v493, 0.0
      %v498 = vmax.f32 %v495, 0.0
      %499 = vst [vmem:[%s235] sm:$0xff] %v497
      %500 = vst [vmem:[%s235 + $0x8] sm:$0xff] %v498
      %s501 = smul.u32 2, %s20
      %p502 = scmp.lt.s32.totalorder %s19, 1
      %s503 = scalar_select %p502, %s19, 1
      %p504 = scmp.lt.s32.totalorder %s501, 1
      %s505 = scalar_select %p504, %s501, 1
      %s506 = smul.addr %s503, 2
      %s507 = sadd.s32 %s505, %s506
      %s508 = smul.addr %s507, 8
      %s509 = scalar_lea.vmem %s4, %s508
      // Predicated region
      $region37: #{conv_block_2d_forward.1} parent=35 // pred_check
        %p510 = pneg %p138
      $region38: #{conv_block_2d_forward.1} parent=35 // pred_check_branch
        %512 = sbr.rel (%p510) target = $region40
      $region39: #{conv_block_2d_forward.1} parent=35 // pred_region
        %s513 = smul.u32 2, %s20
      $region40: #{conv_block_2d_forward.1} parent=35 // pred_fallthru
        _
    $region36: #{conv_block_2d_forward.1} parent=5 // pred_fallthru
      _
    %p514 = scmp.le.s32.totalorder 2, %s10
    // Predicated region
    $region41: #{conv_block_2d_forward.1} parent=5 // pred_check
      %p515 = pneg %p514
    $region42: #{conv_block_2d_forward.1} parent=5 // pred_check_branch
      %517 = sbr.rel (%p515) target = $region44
    $region43: #{conv_block_2d_forward.1} parent=5 // pred_region
      %s518 = ssub.s32 %s10, 2
      // Predicated region
      $region45: #{conv_block_2d_forward.1} parent=43 // pred_check
        %p519 = pneg %p144
      $region46: #{conv_block_2d_forward.1} parent=43 // pred_check_branch
        %521 = sbr.rel (%p519) target = $region48
      $region47: #{conv_block_2d_forward.1} parent=43 // pred_region
        %s522 = smul.u32 2, %s22
        %p523 = scmp.lt.s32.totalorder %s21, 1
        %s524 = scalar_select %p523, %s21, 1
        %p525 = scmp.lt.s32.totalorder %s522, 1
        %s526 = scalar_select %p525, %s522, 1
        %s527 = smul.addr %s524, 2
        %s528 = sadd.s32 %s526, %s527
        %s529 = smul.addr %s528, 8
        %s530 = scalar_lea.vmem %s4, %s529
      $region48: #{conv_block_2d_forward.1} parent=43 // pred_fallthru
        _
    $region44: #{conv_block_2d_forward.1} parent=5 // pred_fallthru
      _
  $region6: #{conv_block_2d_forward.1} parent=0 // loop_footer
    %s14 = sadd.s32 1, %s10
  $region7: #{conv_block_2d_forward.1} parent=0 // loop_footer_branch
    %9 = sbr.rel target = $region3
  $region8: #{conv_block_2d_forward.1} parent=0 // loop_exit
    _

</llo_original>
